<compile_context>
chip_gen: v5e
topology: v5e:2x2
jax: 0.10.0
libtpu: 0.0.40
codegen_flags: <defaults>
</compile_context>

<pallas_src>
import jax
import jax.numpy as jnp
from jax.experimental import pallas as pl
from jax.experimental.pallas import tpu as pltpu

SUBLANE = 8  # f32 sublane count


def _round_up(n, m):
    return ((n + m - 1) // m) * m


def classifier_kernel(x_ref, w1_ref, b1_ref, w2_ref, b2_ref, out_ref):
    # Hidden layer: relu(x @ W1 + b1).  bf16 MXU operands, f32 accumulate.
    x = x_ref[...].astype(w1_ref.dtype)
    h = jnp.dot(x, w1_ref[...], preferred_element_type=jnp.float32) + b1_ref[...]
    h = jnp.maximum(h, 0.0)

    # Logits: h @ W2 + b2 (cast activations back to the MXU compute dtype).
    logits = (
        jnp.dot(h.astype(w2_ref.dtype), w2_ref[...],
                preferred_element_type=jnp.float32)
        + b2_ref[...]
    )

    # Numerically-stable softmax along the last axis, all in f32.
    m = jnp.max(logits, axis=-1, keepdims=True)
    e = jnp.exp(logits - m)
    denom = jnp.sum(e, axis=-1, keepdims=True)
    out_ref[...] = (e / denom).astype(out_ref.dtype)


def prepare_classifier_params(w1, b1, w2, b2, compute_dtype=jnp.bfloat16):
    """One-time (per-init, not per-forward) parameter preparation.

    w1: (x_dim, h_dim)  (transpose of PyTorch's dense.weight)
    b1: (h_dim,)
    w2: (h_dim, y_dim)  (transpose of PyTorch's logits.weight)
    b2: (y_dim,)
    Returns bf16 weights and f32 row-vector biases, ready for the kernel.
    """
    f32 = jnp.float32
    return (
        w1.astype(compute_dtype),
        b1.astype(f32).reshape(1, -1),
        w2.astype(compute_dtype),
        b2.astype(f32).reshape(1, -1),
    )


def _choose_batch_tile(B, tile_b):
    # Sublane-rounded; capped at ceil(B/2) so the grid has >= 2 steps whenever
    # possible (lets the "parallel" batch axis shard across v7x's two TCs).
    half = _round_up(max(1, -(-B // 2)), SUBLANE)
    tb = min(_round_up(max(tile_b, SUBLANE), SUBLANE), half)
    return max(tb, SUBLANE)


def classifier_forward(x, w1c, b1c, w2c, b2c, *, tile_b=512):
    """Classifier forward pass.

    x   : (B, x_dim) float input (passed through unpadded).
    w1c : (x_dim, h_dim) bf16,  b1c: (1, h_dim) f32   (from prepare_classifier_params)
    w2c : (h_dim, y_dim) bf16,  b2c: (1, y_dim) f32
    Returns (B, y_dim) softmax probabilities (float32).
    """
    B, x_dim = x.shape
    h_dim = w1c.shape[1]
    y_dim = w2c.shape[1]

    tb = _choose_batch_tile(B, tile_b)
    grid = (pl.cdiv(B, tb),)

    out = pl.pallas_call(
        classifier_kernel,
        out_shape=jax.ShapeDtypeStruct((B, y_dim), jnp.float32),
        grid_spec=pltpu.PrefetchScalarGridSpec(
            num_scalar_prefetch=0,
            grid=grid,
            in_specs=[
                # x: tiled along batch, double-buffered by the pipeline.
                # Last block dim == full array dim -> legal without padding.
                pl.BlockSpec((tb, x_dim), lambda i: (i, 0)),
                # Weights / biases: same block every grid step -> VMEM-resident.
                pl.BlockSpec((x_dim, h_dim), lambda i: (0, 0)),
                pl.BlockSpec((1, h_dim), lambda i: (0, 0)),
                pl.BlockSpec((h_dim, y_dim), lambda i: (0, 0)),
                pl.BlockSpec((1, y_dim), lambda i: (0, 0)),
            ],
            out_specs=pl.BlockSpec((tb, y_dim), lambda i: (i, 0)),
        ),
        compiler_params=pltpu.CompilerParams(
            # Batch grid axis is embarrassingly parallel (2 TensorCores on v7x).
            dimension_semantics=("parallel",),
        ),
    )(x, w1c, b1c, w2c, b2c)
    return out


def init_linear_params(key, in_dim, out_dim):
    """Deterministic init mimicking nn.Linear default (Kaiming-uniform-ish)."""
    kw, kb = jax.random.split(key)
    bound = 1.0 / jnp.sqrt(in_dim)
    # Stored as (in_dim, out_dim) == transpose of PyTorch's (out_dim, in_dim).
    w = jax.random.uniform(kw, (in_dim, out_dim), jnp.float32, -bound, bound)
    b = jax.random.uniform(kb, (out_dim,), jnp.float32, -bound, bound)
    return w, b


def _reference_bf16(x, w1, b1, w2, b2, compute_dtype=jnp.bfloat16):
    """Pure-JAX reference using the same bf16-operand / f32-accumulate math."""
    h = jnp.maximum(
        jnp.dot(x.astype(compute_dtype), w1.astype(compute_dtype),
                preferred_element_type=jnp.float32) + b1, 0.0)
    logits = jnp.dot(h.astype(compute_dtype), w2.astype(compute_dtype),
                     preferred_element_type=jnp.float32) + b2
    return jax.nn.softmax(logits, axis=-1)


if __name__ == "__main__":
    # dims = [x_dim, h_dim, y_dim] (as in the PyTorch Classifier ctor).
    x_dim, h_dim, y_dim = 32, 64, 16
    batch = 8

    key = jax.random.PRNGKey(0)
    kx, k1, k2, kx2 = jax.random.split(key, 4)

    x = jax.random.normal(kx, (batch, x_dim), jnp.float32)
    w1, b1 = init_linear_params(k1, x_dim, h_dim)
    w2, b2 = init_linear_params(k2, h_dim, y_dim)

    # One-time parameter preparation (hoisted out of the per-forward path).
    w1c, b1c, w2c, b2c = prepare_classifier_params(w1, b1, w2, b2)

    # --- Small-shape run (single grid step) -------------------------------
    out = classifier_forward(x, w1c, b1c, w2c, b2c)
    out = jax.block_until_ready(out)

    assert out.shape == (batch, y_dim)
    # Exact divide -> rows sum to 1 to f32 precision.
    assert jnp.allclose(jnp.sum(out, axis=-1), 1.0, atol=1e-5)

    # Matches a bf16-operand / f32-accumulate JAX reference.
    ref = _reference_bf16(x, w1, b1, w2, b2)
    assert jnp.allclose(out, ref, atol=5e-3, rtol=5e-3)

    # Stays close to the full-f32 PyTorch-style forward (bf16 rounding slack).
    ref_f32 = jax.nn.softmax(
        jnp.maximum(x @ w1 + b1, 0.0) @ w2 + b2, axis=-1)
    assert jnp.allclose(out, ref_f32, atol=3e-2)

    # --- Larger batch: multi-step grid + clipped (partial) edge block -----
    big_b = 300
    xb = jax.random.normal(kx2, (big_b, x_dim), jnp.float32)
    out_big = classifier_forward(xb, w1c, b1c, w2c, b2c, tile_b=128)
    out_big = jax.block_until_ready(out_big)
    assert out_big.shape == (big_b, y_dim)
    assert jnp.allclose(jnp.sum(out_big, axis=-1), 1.0, atol=1e-5)
    ref_big = _reference_bf16(xb, w1, b1, w2, b2)
    assert jnp.allclose(out_big, ref_big, atol=5e-3, rtol=5e-3)

    print("KERNEL_OK")
</pallas_src>

<mosaic_0001>
module attributes {stable_mosaic.version = 11 : i64} {
  func.func @classifier_kernel(%arg0: i32, %arg1: memref<8x32xf32, #tpu.memory_space<vmem>>, %arg2: memref<32x64xbf16, #tpu.memory_space<vmem>>, %arg3: memref<1x64xf32, #tpu.memory_space<vmem>>, %arg4: memref<64x16xbf16, #tpu.memory_space<vmem>>, %arg5: memref<1x16xf32, #tpu.memory_space<vmem>>, %arg6: memref<8x16xf32, #tpu.memory_space<vmem>>) attributes {dimension_semantics = [#tpu.dimension_semantics<parallel>], iteration_bounds = array<i64: 1>, scalar_prefetch = 0 : i64, scratch_operands = 0 : i64, tpu.core_type = #tpu.core_type<tc>, window_params = [{transform_indices = @transform_0, window_bounds = array<i64: 8, 32>}, {pipeline_mode = #tpu.pipeline_mode<synchronous>, transform_indices = @transform_1, window_bounds = array<i64: 32, 64>}, {pipeline_mode = #tpu.pipeline_mode<synchronous>, transform_indices = @transform_2, window_bounds = array<i64: 1, 64>}, {pipeline_mode = #tpu.pipeline_mode<synchronous>, transform_indices = @transform_3, window_bounds = array<i64: 64, 16>}, {pipeline_mode = #tpu.pipeline_mode<synchronous>, transform_indices = @transform_4, window_bounds = array<i64: 1, 16>}, {transform_indices = @transform_5, window_bounds = array<i64: 8, 16>}]} {
    %c0 = arith.constant 0 : index
    %c0_0 = arith.constant 0 : index
    %0 = vector.load %arg1[%c0, %c0_0] : memref<8x32xf32, #tpu.memory_space<vmem>>, vector<8x32xf32>
    %1 = arith.truncf %0 : vector<8x32xf32> to vector<8x32xbf16>
    %c0_1 = arith.constant 0 : index
    %c0_2 = arith.constant 0 : index
    %2 = vector.load %arg2[%c0_1, %c0_2] : memref<32x64xbf16, #tpu.memory_space<vmem>>, vector<32x64xbf16>
    %cst = arith.constant dense<0.000000e+00> : vector<8x64xf32>
    %3 = tpu.matmul %1, %2, %cst {dimension_numbers = #tpu.dot_dimension_numbers<[1], [0], [0], [1], [0, 0, 1, 1], [], []>} : vector<8x32xbf16>, vector<32x64xbf16>, vector<8x64xf32> -> vector<8x64xf32>
    %c0_3 = arith.constant 0 : index
    %c0_4 = arith.constant 0 : index
    %4 = vector.load %arg3[%c0_3, %c0_4] : memref<1x64xf32, #tpu.memory_space<vmem>>, vector<1x64xf32>
    %5 = vector.broadcast %4 : vector<1x64xf32> to vector<8x64xf32>
    %6 = arith.addf %3, %5 : vector<8x64xf32>
    %cst_5 = arith.constant 0.000000e+00 : f32
    %7 = vector.broadcast %cst_5 : f32 to vector<8x64xf32>
    %8 = arith.maximumf %6, %7 : vector<8x64xf32>
    %9 = arith.truncf %8 : vector<8x64xf32> to vector<8x64xbf16>
    %c0_6 = arith.constant 0 : index
    %c0_7 = arith.constant 0 : index
    %10 = vector.load %arg4[%c0_6, %c0_7] : memref<64x16xbf16, #tpu.memory_space<vmem>>, vector<64x16xbf16>
    %cst_8 = arith.constant dense<0.000000e+00> : vector<8x16xf32>
    %11 = tpu.matmul %9, %10, %cst_8 {dimension_numbers = #tpu.dot_dimension_numbers<[1], [0], [0], [1], [0, 0, 1, 1], [], []>} : vector<8x64xbf16>, vector<64x16xbf16>, vector<8x16xf32> -> vector<8x16xf32>
    %c0_9 = arith.constant 0 : index
    %c0_10 = arith.constant 0 : index
    %12 = vector.load %arg5[%c0_9, %c0_10] : memref<1x16xf32, #tpu.memory_space<vmem>>, vector<1x16xf32>
    %13 = vector.broadcast %12 : vector<1x16xf32> to vector<8x16xf32>
    %14 = arith.addf %11, %13 : vector<8x16xf32>
    %cst_11 = arith.constant dense<0xFF800000> : vector<8xf32>
    %15 = vector.multi_reduction <maximumf>, %14, %cst_11 [1] : vector<8x16xf32> to vector<8xf32>
    %16 = vector.shape_cast %15 : vector<8xf32> to vector<8x1xf32>
    %17 = vector.broadcast %16 : vector<8x1xf32> to vector<8x16xf32>
    %18 = arith.subf %14, %17 : vector<8x16xf32>
    %19 = math.exp %18 : vector<8x16xf32>
    %cst_12 = arith.constant dense<0.000000e+00> : vector<8xf32>
    %20 = vector.multi_reduction <add>, %19, %cst_12 [1] : vector<8x16xf32> to vector<8xf32>
    %21 = vector.shape_cast %20 : vector<8xf32> to vector<8x1xf32>
    %22 = vector.broadcast %21 : vector<8x1xf32> to vector<8x16xf32>
    %23 = arith.divf %19, %22 : vector<8x16xf32>
    %c0_13 = arith.constant 0 : index
    %c0_14 = arith.constant 0 : index
    %24 = vector.load %arg6[%c0_13, %c0_14] : memref<8x16xf32, #tpu.memory_space<vmem>>, vector<8x16xf32>
    tpu.vector_store %arg6[%c0_13, %c0_14], %23 {strides = array<i32>} : memref<8x16xf32, #tpu.memory_space<vmem>>, vector<8x16xf32>,
    return
  }
  func.func @transform_0(%arg0: i32) -> (i32, i32) {
    %c0_i32 = arith.constant 0 : i32
    %c0_i32_0 = arith.constant 0 : i32
    return %arg0, %c0_i32 : i32, i32
  }
  func.func @transform_1(%arg0: i32) -> (i32, i32) {
    %c0_i32 = arith.constant 0 : i32
    %c0_i32_0 = arith.constant 0 : i32
    %c0_i32_1 = arith.constant 0 : i32
    return %c0_i32, %c0_i32_0 : i32, i32
  }
  func.func @transform_2(%arg0: i32) -> (i32, i32) {
    %c0_i32 = arith.constant 0 : i32
    %c0_i32_0 = arith.constant 0 : i32
    %c0_i32_1 = arith.constant 0 : i32
    return %c0_i32, %c0_i32_0 : i32, i32
  }
  func.func @transform_3(%arg0: i32) -> (i32, i32) {
    %c0_i32 = arith.constant 0 : i32
    %c0_i32_0 = arith.constant 0 : i32
    %c0_i32_1 = arith.constant 0 : i32
    return %c0_i32, %c0_i32_0 : i32, i32
  }
  func.func @transform_4(%arg0: i32) -> (i32, i32) {
    %c0_i32 = arith.constant 0 : i32
    %c0_i32_0 = arith.constant 0 : i32
    %c0_i32_1 = arith.constant 0 : i32
    return %c0_i32, %c0_i32_0 : i32, i32
  }
  func.func @transform_5(%arg0: i32) -> (i32, i32) {
    %c0_i32 = arith.constant 0 : i32
    %c0_i32_0 = arith.constant 0 : i32
    return %arg0, %c0_i32 : i32, i32
  }
}

</mosaic_0001>

<llo_original>
// kernel: tpu_custom_call.1
$region0: #{tpu_custom_call.1}
  #allocation0 [shape = 'u32[]', space=smem, size = 0x4, offset = 0x4, fixed_abs, tag = 'smem constant byte address 0x4 - core index']
  #allocation1 [shape = 'u32[72,128]{1,0:T(1,128)}', space=vmem, size = 0x9000, scoped, tag = 'internal scratch']
  %s0 = inlined_call_operand.vmem [shape: f32[8,32], index: 0, kind: input, shape index: {}]
  %s1 = inlined_call_operand.vmem [shape: bf16[32,64], index: 1, kind: input, shape index: {}]
  %s2 = inlined_call_operand.vmem [shape: f32[1,64], index: 2, kind: input, shape index: {}]
  %s3 = inlined_call_operand.vmem [shape: bf16[64,16], index: 3, kind: input, shape index: {}]
  %s4 = inlined_call_operand.vmem [shape: f32[1,16], index: 4, kind: input, shape index: {}]
  %s5 = inlined_call_operand.hbm [shape: f32[8,16], index: 5, kind: output, shape index: {}]
  %s6 = sld [smem:[#allocation0]]
  $region30: #{tpu_custom_call.1} parent=0
    _
  %s8 = ssub.s32 1, %s6
  %s9 = scalar_select 0, %s8, %s6
  $region1: #{tpu_custom_call.1} parent=0
    #allocation2 [shape = 'u8[4096]{0}', space=vmem, size = 0x1000, scoped, tag = 'output window, operand 0, single buffered']
    #allocation3 [shape = 's32[1]{0}', space=sflag, size = 0x4, scoped, tag = 'scoped memory for tpu_custom_call.1']
    %10 = vsyncpa [#allocation3], 0
    // Predicated region
    $region2: #{tpu_custom_call.1} parent=1 // pred_check
      _
    $region3: #{tpu_custom_call.1} parent=1 // pred_check_branch
      %12 = sbr.rel (0) target = $region5
    $region4: #{tpu_custom_call.1} parent=1 // pred_region
      _
    $region5: #{tpu_custom_call.1} parent=1 // pred_fallthru
      _
    // Predicated region
    $region6: #{tpu_custom_call.1} parent=1 // pred_check
      _
    $region7: #{tpu_custom_call.1} parent=1 // pred_check_branch
      %14 = sbr.rel (0) target = $region9
    $region8: #{tpu_custom_call.1} parent=1 // pred_region
      _
    $region9: #{tpu_custom_call.1} parent=1 // pred_fallthru
      _
    // Predicated region
    $region10: #{tpu_custom_call.1} parent=1 // pred_check
      _
    $region11: #{tpu_custom_call.1} parent=1 // pred_check_branch
      %16 = sbr.rel (0) target = $region13
    $region12: #{tpu_custom_call.1} parent=1 // pred_region
      _
    $region13: #{tpu_custom_call.1} parent=1 // pred_fallthru
      _
    // Predicated region
    $region14: #{tpu_custom_call.1} parent=1 // pred_check
      _
    $region15: #{tpu_custom_call.1} parent=1 // pred_check_branch
      %18 = sbr.rel (0) target = $region17
    $region16: #{tpu_custom_call.1} parent=1 // pred_region
      _
    $region17: #{tpu_custom_call.1} parent=1 // pred_fallthru
      _
    // Predicated region
    $region18: #{tpu_custom_call.1} parent=1 // pred_check
      _
    $region19: #{tpu_custom_call.1} parent=1 // pred_check_branch
      %20 = sbr.rel (0) target = $region21
    $region20: #{tpu_custom_call.1} parent=1 // pred_region
      _
    $region21: #{tpu_custom_call.1} parent=1 // pred_fallthru
      _
    %v22 = vld [vmem:[%s0] sm:$0xff]
    %v23 = vpack.c.bf16 %v22, %v22
    %v24 = vld [vmem:[%s1] sm:$0xf]
    %v25 = vld [vmem:[%s1 + $0x4] sm:$0xf]
    %v26 = vld [vmem:[%s1 + $0x8] sm:$0xf]
    %v27 = vld [vmem:[%s1 + $0xc] sm:$0xf]
    %v28 = vld [vmem:[%s2] sm:$0x1]
    %v30 = vperm.slane %v28, 0
    %v36 = vunpack.c.l.b16 %v24
    %v37 = vunpack.c.l.b16 %v25
    %v38 = vunpack.c.l.b16 %v26
    %v39 = vunpack.c.l.b16 %v27
    %v40 = vpack.c.b16 %v37, %v36
    %v41 = vpack.c.b16 %v39, %v38
    %vm44 = vcmask 261120
    %v46 = vsel %vm44, %v23, 0
    %48 = vmatpush.bf16.msra.mxu0 0
    %49 = vmatpush.bf16.msra.mxu0 0
    %50 = vmatpush.bf16.msra.mxu0 0
    %51 = vmatpush.bf16.msra.mxu0 0
    %52 = vmatpush.bf16.msra.mxu0 0
    %53 = vmatpush.bf16.msra.mxu0 0
    %54 = vmatpush.bf16.msra.mxu0 %v41
    %55 = vmatpush.bf16.msra.mxu0 %v40
    %56 = vmatmul.bf16.gmra.mxu0 %v46
    %v57 = vpop.f32.mrf.mxu0
    %v58 = vadd.f32 %v30, %v57
    %v59 = vpop.f32.mrf.mxu0
    %60 = vdwg.mxu0
    %v61 = vmax.f32 %v58, 0.0
    %v62 = vpack.c.bf16 %v61, %v61
    %v63 = vld [vmem:[%s3] sm:$0xf]
    %v64 = vld [vmem:[%s3 + $0x4] sm:$0xf]
    %v65 = vld [vmem:[%s3 + $0x8] sm:$0xf]
    %v66 = vld [vmem:[%s3 + $0xc] sm:$0xf]
    %v67 = vld [vmem:[%s3 + $0x10] sm:$0xf]
    %v68 = vld [vmem:[%s3 + $0x14] sm:$0xf]
    %v69 = vld [vmem:[%s3 + $0x18] sm:$0xf]
    %v70 = vld [vmem:[%s3 + $0x1c] sm:$0xf]
    %v71 = vld [vmem:[%s4] sm:$0x1]
    %v73 = vperm.slane %v71, 0
    %v83 = vunpack.c.l.b16 %v63
    %v84 = vunpack.c.l.b16 %v64
    %v85 = vunpack.c.l.b16 %v65
    %v86 = vunpack.c.l.b16 %v66
    %v87 = vunpack.c.l.b16 %v67
    %v88 = vunpack.c.l.b16 %v68
    %v89 = vunpack.c.l.b16 %v69
    %v90 = vunpack.c.l.b16 %v70
    %v91 = vpack.c.b16 %v84, %v83
    %v92 = vpack.c.b16 %v86, %v85
    %v93 = vpack.c.b16 %v88, %v87
    %v94 = vpack.c.b16 %v90, %v89
    %vm99 = vcmask 523264
    %v101 = vsel %vm99, %v62, 0
    %103 = vmatpush.bf16.msra.mxu0 0
    %104 = vmatpush.bf16.msra.mxu0 0
    %105 = vmatpush.bf16.msra.mxu0 0
    %106 = vmatpush.bf16.msra.mxu0 0
    %107 = vmatpush.bf16.msra.mxu0 %v94
    %108 = vmatpush.bf16.msra.mxu0 %v93
    %109 = vmatpush.bf16.msra.mxu0 %v92
    %110 = vmatpush.bf16.msra.mxu0 %v91
    %111 = vmatmul.bf16.gmra.mxu0 %v101
    %v112 = vpop.f32.mrf.mxu0
    %v113 = vadd.f32 %v73, %v112
    %v114 = vpop.f32.mrf.mxu0
    %115 = vdwg.mxu0
    %vm116 = vcmask 130048
    %v117 = vsel %vm116, %v113, -inf
    %118 = vmax.xlane.f32.xlu0 %v117
    %v119 = vpop.xlane.xlu0 %118
    %v120 = vsub.f32 %v113, %v119
    %v121 = vmul.f32 %v120, 1.442695
    %v122 = vpow.pop %v121
    %v123 = vsel %vm116, %v122, 0.0
    %124 = vadd.xlane.f32.xlu0 %v123
    %v125 = vpop.xlane.xlu0 %124
    %v126 = vrcp.pop %v125
    %v127 = vmul.f32 %v125, %v126
    %v128 = vsub.f32 1.0, %v127
    %v129 = vmul.f32 %v126, %v128
    %v130 = vadd.f32 %v126, %v129
    %vm131 = vweird.f32 %v125
    %vm132 = vweird.f32 %v126
    %vm133 = vmor %vm131, %vm132
    %v134 = vsel %vm133, %v126, %v130
    %v135 = vand.u32 2147483647, %v125
    %vm136 = vcmp.eq.f32.partialorder %v135, 8.507059e+37
    %v137 = vand.u32 %v125, 2147483648
    %v138 = vor.u32 1.1754944e-38, %v137
    %v139 = vsel %vm136, %v138, %v134
    %v140 = vmul.f32 %v122, %v139
    %141 = vst.msk [vmem:[#allocation2] sm:$0xff] %vm116, %v140
    // Predicated region
    $region22: #{tpu_custom_call.1} parent=1 // pred_check
      _
    $region23: #{tpu_custom_call.1} parent=1 // pred_check_branch
      %143 = sbr.rel (0) target = $region25
    $region24: #{tpu_custom_call.1} parent=1 // pred_region
      %145 = vsyncadd [#allocation3], 0
      %s147 = sshll.u32 [#allocation2], 4
      %s148 = int_to_ptr.vmem [resolvable:$true] %s147
      %s149 = sshll.u32 %s5, 4
      %s150 = int_to_ptr.hbm [resolvable:$true] %s149
      %152 = dma.vmem_to_hbm [thread:$0]  %s148, 128, %s150, [#allocation3]
    $region25: #{tpu_custom_call.1} parent=1 // pred_fallthru
      _
    // Predicated region
    $region26: #{tpu_custom_call.1} parent=1 // pred_check
      _
    $region27: #{tpu_custom_call.1} parent=1 // pred_check_branch
      %154 = sbr.rel (0) target = $region29
    $region28: #{tpu_custom_call.1} parent=1 // pred_region
      %156 = dma.done [#allocation3], 128
    $region29: #{tpu_custom_call.1} parent=1 // pred_fallthru
      _
    %157 = vsyncpa [#allocation3], 1

</llo_original>
